<compile_context>
chip_gen: v7x
topology: tpu7x:2x2x1
jax: 0.10.0
libtpu: 0.0.40
codegen_flags: <defaults>
</compile_context>

<pallas_src>
import functools

import jax
import jax.numpy as jnp
from jax.experimental import pallas as pl
from jax.experimental.pallas import tpu as pltpu


def _round_up(x, m):
    return ((x + m - 1) // m) * m


def _loss_kernel(yt_ref, yp_ref, out_ref, *, total_rows, rows_tile, row_len):
    """Partial sums of per-row MSE and pearson r for one tile of rows.

    yt_ref / yp_ref : (rows_tile, L) VMEM tiles (rows = flattened (B, N)).
    out_ref         : (1, 8, 128) lane-dense partial-sum block:
                        [0, 0, 0] = sum over valid rows of per-row MSE
                        [0, 0, 1] = sum over valid rows of per-row pearson r
    """
    i = pl.program_id(0)
    L = row_len
    inv_L = jnp.float32(1.0 / L)
    inv_Lm1 = jnp.float32(1.0 / (L - 1)) if L > 1 else jnp.float32(jnp.inf)

    yt = yt_ref[...].astype(jnp.float32)   # (rows_tile, L)
    yp = yp_ref[...].astype(jnp.float32)

    # 5 elementwise passes + 5 lane reductions (vs ~9 passes in the naive
    # form).  Two-pass centering per tile keeps variance / covariance
    # numerically robust (no E[x^2] - E[x]^2 cancellation for large means).
    mx = jnp.sum(yt, axis=1, keepdims=True) * inv_L        # (rows_tile, 1)
    my = jnp.sum(yp, axis=1, keepdims=True) * inv_L
    xc = yt - mx
    yc = yp - my
    sxx = jnp.sum(xc * xc, axis=1, keepdims=True)          # (rows_tile, 1)
    syy = jnp.sum(yc * yc, axis=1, keepdims=True)
    sxy = jnp.sum(xc * yc, axis=1, keepdims=True)

    # Per-row MSE: mean((x - y)^2) = (Sxx - 2*Sxy + Syy)/L + (mx - my)^2
    dm = mx - my
    loss1 = (sxx - 2.0 * sxy + syy) * inv_L + dm * dm      # (rows_tile, 1)

    # Per-row Pearson r (torch.var is unbiased, /(L-1)); rsqrt uses the EUP
    # slot instead of VALU sqrt + divide.
    x_var = sxx * inv_Lm1
    y_var = syy * inv_Lm1
    r = sxy * jax.lax.rsqrt(x_var) * jax.lax.rsqrt(y_var) * inv_L
    r = jnp.nan_to_num(r)   # same defaults as torch.nan_to_num

    # Mask zero-padded rows (when B*N is not a multiple of the row tile).
    row_ids = jax.lax.broadcasted_iota(jnp.int32, (rows_tile, 1), 0) + i * rows_tile
    valid = row_ids < total_rows
    loss1 = jnp.where(valid, loss1, 0.0)
    r = jnp.where(valid, r, 0.0)

    sum_loss1 = jnp.sum(loss1)
    sum_r = jnp.sum(r)

    lane = jax.lax.broadcasted_iota(jnp.int32, (1, 8, 128), 2)
    out_ref[...] = jnp.where(
        lane == 0, sum_loss1, jnp.where(lane == 1, sum_r, 0.0)
    ).astype(jnp.float32)


def loss_function_forward(y_true, y_pred):
    """Pallas TPU implementation of loss_function.forward.

    y_true, y_pred: (B, N, L) float arrays (f32 or bf16).
    Returns three f32 scalars: (mean_loss, mean_pearson, mean_mse).
    """
    assert y_true.shape == y_pred.shape
    B, N, L = y_true.shape
    R = B * N

    yt = y_true.reshape(R, L)
    yp = y_pred.reshape(R, L)

    # Row-tile sizing: ~2 MiB per input block (x 2 inputs x 2 pipeline
    # buffers = ~8 MiB working set) — fits the scoped-VMEM default on every
    # generation incl. v7x's 64 MiB physical, while tiles stay large enough
    # to amortize the ~0.35 us per-grid-step overhead.
    target_block_bytes = 2 * 1024 * 1024
    bytes_per_row = max(1, L) * 4
    rows_target = max(8, (target_block_bytes // bytes_per_row) // 8 * 8)
    rows_tile = min(rows_target, _round_up(R, 8))
    num_blocks = pl.cdiv(R, rows_tile)
    padded_R = num_blocks * rows_tile
    if padded_R != R:
        pad = padded_R - R
        yt = jnp.pad(yt, ((0, pad), (0, 0)))
        yp = jnp.pad(yp, ((0, pad), (0, 0)))

    kernel = functools.partial(
        _loss_kernel, total_rows=R, rows_tile=rows_tile, row_len=L
    )

    row_spec = pl.BlockSpec((rows_tile, L), lambda i: (i, 0))
    partials = pl.pallas_call(
        kernel,
        out_shape=jax.ShapeDtypeStruct((num_blocks, 8, 128), jnp.float32),
        grid_spec=pltpu.PrefetchScalarGridSpec(
            num_scalar_prefetch=0,
            grid=(num_blocks,),
            in_specs=[row_spec, row_spec],
            out_specs=pl.BlockSpec((1, 8, 128), lambda i: (i, 0, 0)),
        ),
        compiler_params=pltpu.CompilerParams(
            dimension_semantics=("parallel",),
            vmem_limit_bytes=32 * 1024 * 1024,
        ),
    )(yt, yp)

    # Tiny final combine on the host-side XLA graph.
    sum_loss1 = jnp.sum(partials[:, 0, 0])
    sum_r = jnp.sum(partials[:, 0, 1])
    mse = sum_loss1 / R
    corr = sum_r / R
    # mean(loss1 - 0.1*r) == mean(loss1) - 0.1*mean(r)  (regular shapes)
    loss = mse - 0.1 * corr
    return loss, corr, mse


def _reference(y_true, y_pred):
    # Pure-JAX reference mirroring the PyTorch semantics.
    L = y_true.shape[2]
    loss1 = jnp.mean(jnp.square(y_true - y_pred), axis=2)
    xm = jnp.mean(y_true, axis=2, keepdims=True)
    ym = jnp.mean(y_pred, axis=2, keepdims=True)
    xv = jnp.var(y_true, axis=2, ddof=1)
    yv = jnp.var(y_pred, axis=2, ddof=1)
    r = jnp.sum((y_true - xm) * (y_pred - ym), axis=2)
    r = r / (L * jnp.sqrt(xv) * jnp.sqrt(yv))
    r = jnp.nan_to_num(r)
    loss = loss1 - 0.1 * r
    return jnp.mean(jnp.mean(loss, axis=1)), jnp.mean(r), jnp.mean(loss1)


if __name__ == "__main__":
    key = jax.random.PRNGKey(0)
    k1, k2 = jax.random.split(key)
    B, N, L = 2, 8, 128
    y_true = jax.random.normal(k1, (B, N, L), dtype=jnp.float32)
    y_pred = jax.random.normal(k2, (B, N, L), dtype=jnp.float32)

    out = loss_function_forward(y_true, y_pred)
    out = jax.block_until_ready(out)

    ref = _reference(y_true, y_pred)
    for got, want in zip(out, ref):
        assert jnp.allclose(got, want, atol=1e-4, rtol=1e-4), (got, want)

    print("KERNEL_OK")
</pallas_src>

<mosaic_0001>
module attributes {stable_mosaic.version = 11 : i64} {
  func.func @_loss_kernel(%arg0: i32, %arg1: memref<16x128xf32, #tpu.memory_space<vmem>>, %arg2: memref<16x128xf32, #tpu.memory_space<vmem>>, %arg3: memref<1x8x128xf32, #tpu.memory_space<vmem>>) attributes {dimension_semantics = [#tpu.dimension_semantics<parallel>], iteration_bounds = array<i64: 1>, scalar_prefetch = 0 : i64, scratch_operands = 0 : i64, tpu.core_type = #tpu.core_type<tc>, window_params = [{transform_indices = @transform_0, window_bounds = array<i64: 16, 128>}, {transform_indices = @transform_1, window_bounds = array<i64: 16, 128>}, {transform_indices = @transform_2, window_bounds = array<i64: 1, 8, 128>}]} {
    %c0 = arith.constant 0 : index
    %c0_0 = arith.constant 0 : index
    %0 = vector.load %arg1[%c0, %c0_0] : memref<16x128xf32, #tpu.memory_space<vmem>>, vector<16x128xf32>
    %c0_1 = arith.constant 0 : index
    %c0_2 = arith.constant 0 : index
    %1 = vector.load %arg2[%c0_1, %c0_2] : memref<16x128xf32, #tpu.memory_space<vmem>>, vector<16x128xf32>
    %cst = arith.constant dense<0.000000e+00> : vector<16xf32>
    %2 = vector.multi_reduction <add>, %0, %cst [1] : vector<16x128xf32> to vector<16xf32>
    %3 = vector.shape_cast %2 : vector<16xf32> to vector<16x1xf32>
    %cst_3 = arith.constant 7.812500e-03 : f32
    %4 = vector.broadcast %cst_3 : f32 to vector<16x1xf32>
    %5 = arith.mulf %3, %4 : vector<16x1xf32>
    %cst_4 = arith.constant dense<0.000000e+00> : vector<16xf32>
    %6 = vector.multi_reduction <add>, %1, %cst_4 [1] : vector<16x128xf32> to vector<16xf32>
    %7 = vector.shape_cast %6 : vector<16xf32> to vector<16x1xf32>
    %cst_5 = arith.constant 7.812500e-03 : f32
    %8 = vector.broadcast %cst_5 : f32 to vector<16x1xf32>
    %9 = arith.mulf %7, %8 : vector<16x1xf32>
    %10 = vector.broadcast %5 : vector<16x1xf32> to vector<16x128xf32>
    %11 = arith.subf %0, %10 : vector<16x128xf32>
    %12 = vector.broadcast %9 : vector<16x1xf32> to vector<16x128xf32>
    %13 = arith.subf %1, %12 : vector<16x128xf32>
    %14 = arith.mulf %11, %11 : vector<16x128xf32>
    %cst_6 = arith.constant dense<0.000000e+00> : vector<16xf32>
    %15 = vector.multi_reduction <add>, %14, %cst_6 [1] : vector<16x128xf32> to vector<16xf32>
    %16 = vector.shape_cast %15 : vector<16xf32> to vector<16x1xf32>
    %17 = arith.mulf %13, %13 : vector<16x128xf32>
    %cst_7 = arith.constant dense<0.000000e+00> : vector<16xf32>
    %18 = vector.multi_reduction <add>, %17, %cst_7 [1] : vector<16x128xf32> to vector<16xf32>
    %19 = vector.shape_cast %18 : vector<16xf32> to vector<16x1xf32>
    %20 = arith.mulf %11, %13 : vector<16x128xf32>
    %cst_8 = arith.constant dense<0.000000e+00> : vector<16xf32>
    %21 = vector.multi_reduction <add>, %20, %cst_8 [1] : vector<16x128xf32> to vector<16xf32>
    %22 = vector.shape_cast %21 : vector<16xf32> to vector<16x1xf32>
    %23 = arith.subf %5, %9 : vector<16x1xf32>
    %cst_9 = arith.constant 2.000000e+00 : f32
    %24 = vector.broadcast %cst_9 : f32 to vector<16x1xf32>
    %25 = arith.mulf %24, %22 : vector<16x1xf32>
    %26 = arith.subf %16, %25 : vector<16x1xf32>
    %27 = arith.addf %26, %19 : vector<16x1xf32>
    %cst_10 = arith.constant 7.812500e-03 : f32
    %28 = vector.broadcast %cst_10 : f32 to vector<16x1xf32>
    %29 = arith.mulf %27, %28 : vector<16x1xf32>
    %30 = arith.mulf %23, %23 : vector<16x1xf32>
    %31 = arith.addf %29, %30 : vector<16x1xf32>
    %cst_11 = arith.constant 0.00787401571 : f32
    %32 = vector.broadcast %cst_11 : f32 to vector<16x1xf32>
    %33 = arith.mulf %16, %32 : vector<16x1xf32>
    %cst_12 = arith.constant 0.00787401571 : f32
    %34 = vector.broadcast %cst_12 : f32 to vector<16x1xf32>
    %35 = arith.mulf %19, %34 : vector<16x1xf32>
    %36 = math.rsqrt %33 : vector<16x1xf32>
    %37 = arith.mulf %22, %36 : vector<16x1xf32>
    %38 = math.rsqrt %35 : vector<16x1xf32>
    %39 = arith.mulf %37, %38 : vector<16x1xf32>
    %cst_13 = arith.constant 7.812500e-03 : f32
    %40 = vector.broadcast %cst_13 : f32 to vector<16x1xf32>
    %41 = arith.mulf %39, %40 : vector<16x1xf32>
    %42 = arith.cmpf one, %41, %41 : vector<16x1xf32>
    %cst_14 = arith.constant 0.000000e+00 : f32
    %43 = vector.broadcast %cst_14 : f32 to vector<16x1xf32>
    %44 = arith.select %42, %43, %41 : vector<16x1xi1>, vector<16x1xf32>
    %cst_15 = arith.constant 0x7F800000 : f32
    %45 = vector.broadcast %cst_15 : f32 to vector<16x1xf32>
    %46 = arith.cmpf oeq, %44, %45 : vector<16x1xf32>
    %cst_16 = arith.constant 3.40282347E+38 : f32
    %47 = vector.broadcast %cst_16 : f32 to vector<16x1xf32>
    %48 = arith.select %46, %47, %44 : vector<16x1xi1>, vector<16x1xf32>
    %cst_17 = arith.constant 0xFF800000 : f32
    %49 = vector.broadcast %cst_17 : f32 to vector<16x1xf32>
    %50 = arith.cmpf oeq, %48, %49 : vector<16x1xf32>
    %cst_18 = arith.constant -3.40282347E+38 : f32
    %51 = vector.broadcast %cst_18 : f32 to vector<16x1xf32>
    %52 = arith.select %50, %51, %48 : vector<16x1xi1>, vector<16x1xf32>
    %53 = tpu.iota {dimensions = array<i32: 0>} : vector<16x1xi32>
    %c16_i32 = arith.constant 16 : i32
    %54 = arith.muli %arg0, %c16_i32 : i32
    %55 = vector.broadcast %54 : i32 to vector<16x1xi32>
    %56 = arith.addi %53, %55 : vector<16x1xi32>
    %c16_i32_19 = arith.constant 16 : i32
    %57 = vector.broadcast %c16_i32_19 : i32 to vector<16x1xi32>
    %58 = arith.cmpi slt, %56, %57 : vector<16x1xi32>
    %cst_20 = arith.constant 0.000000e+00 : f32
    %59 = vector.broadcast %cst_20 : f32 to vector<16x1xf32>
    %60 = arith.select %58, %31, %59 : vector<16x1xi1>, vector<16x1xf32>
    %cst_21 = arith.constant 0.000000e+00 : f32
    %61 = vector.broadcast %cst_21 : f32 to vector<16x1xf32>
    %62 = arith.select %58, %52, %61 : vector<16x1xi1>, vector<16x1xf32>
    %63 = vector.shape_cast %60 : vector<16x1xf32> to vector<1x16x1xf32>
    %cst_22 = arith.constant dense<0.000000e+00> : vector<1xf32>
    %64 = vector.multi_reduction <add>, %63, %cst_22 [1, 2] : vector<1x16x1xf32> to vector<1xf32>
    %65 = vector.shape_cast %64 : vector<1xf32> to vector<1x1x1xf32>
    %66 = vector.extract %65[0, 0, 0] : f32 from vector<1x1x1xf32>
    %67 = vector.shape_cast %62 : vector<16x1xf32> to vector<1x16x1xf32>
    %cst_23 = arith.constant dense<0.000000e+00> : vector<1xf32>
    %68 = vector.multi_reduction <add>, %67, %cst_23 [1, 2] : vector<1x16x1xf32> to vector<1xf32>
    %69 = vector.shape_cast %68 : vector<1xf32> to vector<1x1x1xf32>
    %70 = vector.extract %69[0, 0, 0] : f32 from vector<1x1x1xf32>
    %71 = tpu.iota {dimensions = array<i32: 2>} : vector<1x8x128xi32>
    %c0_i32 = arith.constant 0 : i32
    %72 = vector.broadcast %c0_i32 : i32 to vector<1x8x128xi32>
    %73 = arith.cmpi eq, %71, %72 : vector<1x8x128xi32>
    %c1_i32 = arith.constant 1 : i32
    %74 = vector.broadcast %c1_i32 : i32 to vector<1x8x128xi32>
    %75 = arith.cmpi eq, %71, %74 : vector<1x8x128xi32>
    %cst_24 = arith.constant 0.000000e+00 : f32
    %76 = vector.broadcast %70 : f32 to vector<1x8x128xf32>
    %77 = vector.broadcast %cst_24 : f32 to vector<1x8x128xf32>
    %78 = arith.select %75, %76, %77 : vector<1x8x128xi1>, vector<1x8x128xf32>
    %79 = vector.broadcast %66 : f32 to vector<1x8x128xf32>
    %80 = arith.select %73, %79, %78 : vector<1x8x128xi1>, vector<1x8x128xf32>
    %c0_25 = arith.constant 0 : index
    %c0_26 = arith.constant 0 : index
    %c0_27 = arith.constant 0 : index
    %81 = vector.load %arg3[%c0_25, %c0_26, %c0_27] : memref<1x8x128xf32, #tpu.memory_space<vmem>>, vector<1x8x128xf32>
    tpu.vector_store %arg3[%c0_25, %c0_26, %c0_27], %80 {strides = array<i32>} : memref<1x8x128xf32, #tpu.memory_space<vmem>>, vector<1x8x128xf32>,
    return
  }
  func.func @transform_0(%arg0: i32) -> (i32, i32) {
    %c0_i32 = arith.constant 0 : i32
    %c0_i32_0 = arith.constant 0 : i32
    return %arg0, %c0_i32 : i32, i32
  }
  func.func @transform_1(%arg0: i32) -> (i32, i32) {
    %c0_i32 = arith.constant 0 : i32
    %c0_i32_0 = arith.constant 0 : i32
    return %arg0, %c0_i32 : i32, i32
  }
  func.func @transform_2(%arg0: i32) -> (i32, i32, i32) {
    %c0_i32 = arith.constant 0 : i32
    %c0_i32_0 = arith.constant 0 : i32
    %c0_i32_1 = arith.constant 0 : i32
    return %arg0, %c0_i32, %c0_i32_0 : i32, i32, i32
  }
}

</mosaic_0001>

<llo_original>
// kernel: tpu_custom_call.1
$region0: #{tpu_custom_call.1}
  #allocation0 [shape = 'u32[]', space=smem, size = 0x4, offset = 0x4, fixed_abs, tag = 'smem constant byte address 0x4 - core index']
  #allocation1 [shape = 'u32[144,128]{1,0:T(1,128)}', space=vmem, size = 0x12000, scoped, tag = 'internal scratch']
  %s0 = inlined_call_operand.hbm [shape: f32[16,128], index: 0, kind: input, shape index: {}]
  %s1 = inlined_call_operand.hbm [shape: f32[16,128], index: 1, kind: input, shape index: {}]
  %s2 = inlined_call_operand.hbm [shape: f32[1,8,128], index: 2, kind: output, shape index: {}]
  %s3 = sld [smem:[#allocation0]]
  $region26: #{tpu_custom_call.1} parent=0
    _
  %s5 = ssub.s32 1, %s3
  %s6 = scalar_select 0, %s5, %s3
  $region1: #{tpu_custom_call.1} parent=0
    #allocation2 [shape = 'u8[8192]{0}', space=vmem, size = 0x2000, scoped, tag = 'input window, operand 0, single buffered']
    #allocation3 [shape = 's32[1]{0}', space=sflag, size = 0x4, scoped, tag = 'scoped memory for tpu_custom_call.1']
    #allocation4 [shape = 's32[1]{0}', space=sflag, size = 0x4, scoped, tag = 'scoped memory for tpu_custom_call.1']
    #allocation5 [shape = 'u8[8192]{0}', space=vmem, size = 0x2000, scoped, tag = 'input window, operand 1, single buffered']
    #allocation6 [shape = 's32[1]{0}', space=sflag, size = 0x4, scoped, tag = 'scoped memory for tpu_custom_call.1']
    #allocation7 [shape = 'u8[4096]{0}', space=vmem, size = 0x1000, scoped, tag = 'output window, operand 0, single buffered']
    %7 = vsyncpa [#allocation3], 0
    %8 = vsyncpa [#allocation6], 0
    %9 = vsyncpa [#allocation4], 0
    // Predicated region
    $region2: #{tpu_custom_call.1} parent=1 // pred_check
      _
    $region3: #{tpu_custom_call.1} parent=1 // pred_check_branch
      %11 = sbr.rel (0) target = $region5
    $region4: #{tpu_custom_call.1} parent=1 // pred_region
      %s13 = ssub.s32 256, 256
      %14 = vsyncadd [#allocation3], %s13
      %s15 = sshll.u32 [#allocation2], 4
      %s16 = int_to_ptr.vmem [resolvable:$true] %s15
      %21 = dma.hbm_to_vmem [thread:$0]  %s0, 256, %s16, [#allocation3], 128, 128, 8
    $region5: #{tpu_custom_call.1} parent=1 // pred_fallthru
      _
    // Predicated region
    $region6: #{tpu_custom_call.1} parent=1 // pred_check
      _
    $region7: #{tpu_custom_call.1} parent=1 // pred_check_branch
      %23 = sbr.rel (0) target = $region9
    $region8: #{tpu_custom_call.1} parent=1 // pred_region
      %s25 = ssub.s32 256, 256
      %26 = vsyncadd [#allocation6], %s25
      %s27 = sshll.u32 [#allocation5], 4
      %s28 = int_to_ptr.vmem [resolvable:$true] %s27
      %33 = dma.hbm_to_vmem [thread:$0]  %s1, 256, %s28, [#allocation6], 128, 128, 8
    $region9: #{tpu_custom_call.1} parent=1 // pred_fallthru
      _
    // Predicated region
    $region10: #{tpu_custom_call.1} parent=1 // pred_check
      _
    $region11: #{tpu_custom_call.1} parent=1 // pred_check_branch
      %35 = sbr.rel (0) target = $region13
    $region12: #{tpu_custom_call.1} parent=1 // pred_region
      %36 = dma.done [#allocation3], 256
    $region13: #{tpu_custom_call.1} parent=1 // pred_fallthru
      _
    // Predicated region
    $region14: #{tpu_custom_call.1} parent=1 // pred_check
      _
    $region15: #{tpu_custom_call.1} parent=1 // pred_check_branch
      %38 = sbr.rel (0) target = $region17
    $region16: #{tpu_custom_call.1} parent=1 // pred_region
      %39 = dma.done [#allocation6], 256
    $region17: #{tpu_custom_call.1} parent=1 // pred_fallthru
      _
    %v40 = vld [vmem:[#allocation2] sm:$0xff]
    %v41 = vld [vmem:[#allocation2 + $0x8] sm:$0xff]
    %v42 = vld [vmem:[#allocation5] sm:$0xff]
    %v43 = vld [vmem:[#allocation5 + $0x8] sm:$0xff]
    %44 = vadd.xlane.f32.xlu0 %v40
    %v45 = vpop.xlane.xlu0 %44
    %46 = vadd.xlane.f32.xlu0 %v41
    %v47 = vpop.xlane.xlu0 %46
    %v48 = vmul.f32 %v45, 0.0078125
    %v49 = vmul.f32 %v47, 0.0078125
    %50 = vadd.xlane.f32.xlu0 %v42
    %v51 = vpop.xlane.xlu0 %50
    %52 = vadd.xlane.f32.xlu0 %v43
    %v53 = vpop.xlane.xlu0 %52
    %v54 = vmul.f32 %v51, 0.0078125
    %v55 = vmul.f32 %v53, 0.0078125
    %v56 = vsub.f32 %v40, %v48
    %v57 = vsub.f32 %v41, %v49
    %v58 = vsub.f32 %v42, %v54
    %v59 = vsub.f32 %v43, %v55
    %v60 = vmul.f32 %v56, %v56
    %v61 = vmul.f32 %v57, %v57
    %62 = vadd.xlane.f32.xlu0 %v60
    %v63 = vpop.xlane.xlu0 %62
    %64 = vadd.xlane.f32.xlu0 %v61
    %v65 = vpop.xlane.xlu0 %64
    %v66 = vmul.f32 %v58, %v58
    %v67 = vmul.f32 %v59, %v59
    %68 = vadd.xlane.f32.xlu0 %v66
    %v69 = vpop.xlane.xlu0 %68
    %70 = vadd.xlane.f32.xlu0 %v67
    %v71 = vpop.xlane.xlu0 %70
    %v72 = vmul.f32 %v56, %v58
    %v73 = vmul.f32 %v57, %v59
    %74 = vadd.xlane.f32.xlu0 %v72
    %v75 = vpop.xlane.xlu0 %74
    %76 = vadd.xlane.f32.xlu0 %v73
    %v77 = vpop.xlane.xlu0 %76
    %v78 = vsub.f32 %v48, %v54
    %v79 = vsub.f32 %v49, %v55
    %v80 = vmul.f32 %v75, 2.0
    %v81 = vmul.f32 %v77, 2.0
    %v82 = vsub.f32 %v63, %v80
    %v83 = vsub.f32 %v65, %v81
    %v84 = vadd.f32 %v82, %v69
    %v85 = vadd.f32 %v83, %v71
    %v86 = vmul.f32 %v84, 0.0078125
    %v87 = vmul.f32 %v85, 0.0078125
    %v88 = vmul.f32 %v78, %v78
    %v89 = vmul.f32 %v79, %v79
    %v90 = vadd.f32 %v86, %v88
    %v91 = vadd.f32 %v87, %v89
    %v92 = vmul.f32 %v63, 0.007874016
    %v93 = vmul.f32 %v65, 0.007874016
    %v94 = vmul.f32 %v69, 0.007874016
    %v95 = vmul.f32 %v71, 0.007874016
    %v96 = vrsqrt.pop %v92
    %v97 = vrsqrt.pop %v93
    %v98 = vmul.f32 %v75, %v96
    %v99 = vmul.f32 %v77, %v97
    %v100 = vrsqrt.pop %v94
    %v101 = vrsqrt.pop %v95
    %v102 = vmul.f32 %v98, %v100
    %v103 = vmul.f32 %v99, %v101
    %v104 = vmul.f32 %v102, 0.0078125
    %v105 = vmul.f32 %v103, 0.0078125
    %vm106 = vcmp.ne.f32.partialorder %v104, %v104
    %vm107 = vcmp.ne.f32.partialorder %v105, %v105
    %v108 = vsel %vm106, 0.0, %v104
    %v109 = vsel %vm107, 0.0, %v105
    %vm110 = vcmp.eq.f32.partialorder %v108, inf
    %vm111 = vcmp.eq.f32.partialorder %v109, inf
    %v112 = vsel %vm110, 3.4028235e+38, %v108
    %v113 = vsel %vm111, 3.4028235e+38, %v109
    %vm114 = vcmp.eq.f32.partialorder %v112, -inf
    %vm115 = vcmp.eq.f32.partialorder %v113, -inf
    %v116 = vsel %vm114, -3.4028235e+38, %v112
    %v117 = vsel %vm115, -3.4028235e+38, %v113
    %v118 = vlaneseq
    %v119 = vshrl.u32 %v118, 7
    %v120 = vadd.s32 %v119, 8
    %s121 = smul.u32 0, 16
    %v122 = vstv %s121
    %v123 = vadd.s32 %v119, %v122
    %v124 = vadd.s32 %v120, %v122
    %vm125 = vcmp.lt.s32.totalorder %v123, 16
    %vm126 = vcmp.lt.s32.totalorder %v124, 16
    %v127 = vsel %vm125, %v90, 0.0
    %v128 = vsel %vm126, %v91, 0.0
    %v129 = vsel %vm125, %v116, 0.0
    %v130 = vsel %vm126, %v117, 0.0
    %vm131 = vcmask 7168
    %v132 = vsel %vm131, %v127, 0.0
    %v133 = vsel %vm131, %v128, 0.0
    %v134 = vadd.f32 %v132, %v133
    %135 = vadd.xlane.f32.xlu0 %v134
    %v136 = vpop.xlane.xlu0 %135
    %v137 = vrot.slane %v136, 4
    %v138 = vadd.f32 %v136, %v137
    %v139 = vrot.slane %v138, 2
    %v140 = vadd.f32 %v138, %v139
    %v141 = vrot.slane %v140, 1
    %v142 = vadd.f32 %v140, %v141
    %s143 = vtos %v142
    %v144 = vsel %vm131, %v129, 0.0
    %v145 = vsel %vm131, %v130, 0.0
    %v146 = vadd.f32 %v144, %v145
    %147 = vadd.xlane.f32.xlu0 %v146
    %v148 = vpop.xlane.xlu0 %147
    %v149 = vrot.slane %v148, 4
    %v150 = vadd.f32 %v148, %v149
    %v151 = vrot.slane %v150, 2
    %v152 = vadd.f32 %v150, %v151
    %v153 = vrot.slane %v152, 1
    %v154 = vadd.f32 %v152, %v153
    %s155 = vtos %v154
    %v156 = vlaneseq
    %v157 = vand.u32 %v156, 127
    %vm158 = vcmp.eq.s32.totalorder %v157, 0
    %vm159 = vcmp.eq.s32.totalorder %v157, 1
    %v160 = vstv %s155
    %v161 = vsel %vm159, %v160, 0.0
    %v162 = vstv %s143
    %v163 = vsel %vm158, %v162, %v161
    %164 = vst [vmem:[#allocation7] sm:$0xff] %v163
    // Predicated region
    $region18: #{tpu_custom_call.1} parent=1 // pred_check
      _
    $region19: #{tpu_custom_call.1} parent=1 // pred_check_branch
      %166 = sbr.rel (0) target = $region21
    $region20: #{tpu_custom_call.1} parent=1 // pred_region
      %s168 = ssub.s32 128, 128
      %169 = vsyncadd [#allocation4], %s168
      %s171 = sshll.u32 [#allocation7], 4
      %s172 = int_to_ptr.vmem [resolvable:$true] %s171
      %174 = dma.vmem_to_hbm [thread:$0]  %s172, 128, %s2, [#allocation4]
    $region21: #{tpu_custom_call.1} parent=1 // pred_fallthru
      _
    // Predicated region
    $region22: #{tpu_custom_call.1} parent=1 // pred_check
      _
    $region23: #{tpu_custom_call.1} parent=1 // pred_check_branch
      %176 = sbr.rel (0) target = $region25
    $region24: #{tpu_custom_call.1} parent=1 // pred_region
      %177 = dma.done [#allocation4], 128
    $region25: #{tpu_custom_call.1} parent=1 // pred_fallthru
      _
    %178 = vsyncpa [#allocation3], 1
    %179 = vsyncpa [#allocation6], 1
    %180 = vsyncpa [#allocation4], 1

</llo_original>
